<compile_context>
chip_gen: v5e
topology: v5e:2x2
jax: 0.10.0
libtpu: 0.0.40
codegen_flags: <defaults>
</compile_context>

<pallas_src>
import functools

import jax
import jax.numpy as jnp
from jax.experimental import pallas as pl
from jax.experimental.pallas import tpu as pltpu

_LANES = 128            # vreg lane width (last dim must be lane-dense)
_MAX_TILE_ROWS = 1024   # 1024 x 128 x 4B = 512 KiB per buffer (f32)


def _copy_kernel(z_ref, o_ref):
    # Identity: one unmasked full-tile (tile_rows x 128) store per grid step.
    o_ref[...] = z_ref[...]


@jax.jit
def synthetic_target_forward_kernel(z):
    """Optional measurable Pallas data path for SyntheticTarget.forward.

    The reference forward is a no-op, so this identity kernel is NOT called
    from forward() by default; it only exists so an on-chip, roofline-friendly
    copy path can be exercised/tested.
    """
    orig_shape = z.shape
    orig_dtype = z.dtype
    n = int(z.size)

    # Sublane quantum depends on element width: f32 -> 8, bf16 -> 16, int8 -> 32.
    itemsize = jnp.dtype(orig_dtype).itemsize
    sublane_q = 32 // itemsize

    # Repack to a lane-dense (rows, 128) slab, padded so rows is a multiple of
    # the tile height (which itself is a multiple of the sublane quantum).
    rows = pl.cdiv(n, _LANES)
    rows_q = ((rows + sublane_q - 1) // sublane_q) * sublane_q
    tile_rows = min(_MAX_TILE_ROWS, rows_q)
    rows_padded = ((rows_q + tile_rows - 1) // tile_rows) * tile_rows
    n_padded = rows_padded * _LANES

    flat = jnp.reshape(z, (-1,))
    flat = jnp.pad(flat, (0, n_padded - n))
    slab = jnp.reshape(flat, (rows_padded, _LANES))

    grid = (rows_padded // tile_rows,)

    out = pl.pallas_call(
        _copy_kernel,
        out_shape=jax.ShapeDtypeStruct((rows_padded, _LANES), orig_dtype),
        grid_spec=pltpu.PrefetchScalarGridSpec(
            num_scalar_prefetch=0,
            grid=grid,
            in_specs=[pl.BlockSpec((tile_rows, _LANES), lambda i: (i, 0))],
            out_specs=pl.BlockSpec((tile_rows, _LANES), lambda i: (i, 0)),
        ),
        # In-place on the internal padded slab: no separate output HBM buffer.
        input_output_aliases={0: 0},
        compiler_params=pltpu.CompilerParams(
            dimension_semantics=("parallel",),      # shards across v7x's 2 TCs
            vmem_limit_bytes=32 * 1024 * 1024,       # tiles are tiny; safe on 64 MiB v7x VMEM
        ),
    )(slab)

    return jnp.reshape(jnp.reshape(out, (-1,))[:n], orig_shape)


class SyntheticTarget:
    """JAX/Pallas port of the synthetic target base class."""

    def __init__(self, data_dim=2, debug_run_kernel=False):
        self.data_dim = data_dim
        # Opt-in only: launching an identity kernel whose result is discarded
        # is pure dead HBM traffic, so it is gated behind an explicit flag.
        self._debug_run_kernel = debug_run_kernel

    @property
    def logZ(self):
        # TODO(synk): reference property body is `pass` (no log-partition
        # function defined for the abstract base) -> None.
        return None

    @property
    def get_all(self):
        return (self, self.logZ, self.data_dim)

    def forward(self, z, x=None):
        # Reference forward is `pass` -> returns None.  No kernel launch here
        # by default (perf review: the result would be discarded dead work).
        if self._debug_run_kernel:
            jax.block_until_ready(synthetic_target_forward_kernel(z))
        return None

    __call__ = forward


if __name__ == "__main__":
    key = jax.random.PRNGKey(0)
    batch, data_dim = 8, 2
    z = jax.random.normal(key, (batch, data_dim), dtype=jnp.float32)

    target = SyntheticTarget(data_dim=data_dim)

    # Run the Pallas identity path once directly and block on its result.
    out = synthetic_target_forward_kernel(z)
    out = jax.block_until_ready(out)
    assert out.shape == z.shape and out.dtype == z.dtype
    assert bool(jnp.allclose(out, z))

    # Exercise the module API for semantic parity with the reference.
    result = target(z)
    assert result is None
    assert target.logZ is None
    _self, _logZ, _dim = target.get_all
    assert _self is target and _logZ is None and _dim == data_dim

    print("KERNEL_OK")
</pallas_src>

<mosaic_0001>
module attributes {stable_mosaic.version = 11 : i64} {
  func.func @_copy_kernel(%arg0: i32, %arg1: memref<8x128xf32, #tpu.memory_space<vmem>>, %arg2: memref<8x128xf32, #tpu.memory_space<vmem>>) attributes {dimension_semantics = [#tpu.dimension_semantics<parallel>], iteration_bounds = array<i64: 1>, scalar_prefetch = 0 : i64, scratch_operands = 0 : i64, tpu.core_type = #tpu.core_type<tc>, window_params = [{transform_indices = @transform_0, window_bounds = array<i64: 8, 128>}, {transform_indices = @transform_1, window_bounds = array<i64: 8, 128>}]} {
    %c0 = arith.constant 0 : index
    %c0_0 = arith.constant 0 : index
    %0 = vector.load %arg1[%c0, %c0_0] : memref<8x128xf32, #tpu.memory_space<vmem>>, vector<8x128xf32>
    %c0_1 = arith.constant 0 : index
    %c0_2 = arith.constant 0 : index
    %1 = vector.load %arg2[%c0_1, %c0_2] : memref<8x128xf32, #tpu.memory_space<vmem>>, vector<8x128xf32>
    tpu.vector_store %arg2[%c0_1, %c0_2], %0 {strides = array<i32>} : memref<8x128xf32, #tpu.memory_space<vmem>>, vector<8x128xf32>,
    return
  }
  func.func @transform_0(%arg0: i32) -> (i32, i32) {
    %c0_i32 = arith.constant 0 : i32
    %c0_i32_0 = arith.constant 0 : i32
    return %arg0, %c0_i32 : i32, i32
  }
  func.func @transform_1(%arg0: i32) -> (i32, i32) {
    %c0_i32 = arith.constant 0 : i32
    %c0_i32_0 = arith.constant 0 : i32
    return %arg0, %c0_i32 : i32, i32
  }
}

</mosaic_0001>

<llo_original>
// kernel: synthetic_target_forward_kernel.1
$region0: #{synthetic_target_forward_kernel.1}
  #allocation0 [shape = 'u32[]', space=smem, size = 0x4, offset = 0x4, fixed_abs, tag = 'smem constant byte address 0x4 - core index']
  #allocation1 [shape = 'u32[72,128]{1,0:T(1,128)}', space=vmem, size = 0x9000, scoped, tag = 'internal scratch']
  %s0 = inlined_call_operand.vmem [shape: f32[8,128], index: 0, kind: input, shape index: {}, may-alias: {0,1}]
  %s1 = inlined_call_operand.vmem [shape: f32[8,128], index: 1, kind: output, shape index: {}, may-alias: {0,1}]
  %s2 = sld [smem:[#allocation0]]
  $region14: #{synthetic_target_forward_kernel.1} parent=0
    _
  %s4 = ssub.s32 1, %s2
  %s5 = scalar_select 0, %s4, %s2
  // Predicated region
  $region2: #{synthetic_target_forward_kernel.1} parent=0 // pred_check
    _
  $region3: #{synthetic_target_forward_kernel.1} parent=0 // pred_check_branch
    %7 = sbr.rel (0) target = $region5
  $region4: #{synthetic_target_forward_kernel.1} parent=0 // pred_region
    _
  $region5: #{synthetic_target_forward_kernel.1} parent=0 // pred_fallthru
    _
  %v8 = vld [vmem:[%s0] sm:$0xff]
  %9 = vst [vmem:[%s1] sm:$0xff] %v8
  // Predicated region
  $region6: #{synthetic_target_forward_kernel.1} parent=0 // pred_check
    _
  $region7: #{synthetic_target_forward_kernel.1} parent=0 // pred_check_branch
    %11 = sbr.rel (0) target = $region9
  $region8: #{synthetic_target_forward_kernel.1} parent=0 // pred_region
    _
  $region9: #{synthetic_target_forward_kernel.1} parent=0 // pred_fallthru
    _
  // Predicated region
  $region10: #{synthetic_target_forward_kernel.1} parent=0 // pred_check
    _
  $region11: #{synthetic_target_forward_kernel.1} parent=0 // pred_check_branch
    %13 = sbr.rel (0) target = $region13
  $region12: #{synthetic_target_forward_kernel.1} parent=0 // pred_region
    _
  $region13: #{synthetic_target_forward_kernel.1} parent=0 // pred_fallthru
    _

</llo_original>
